<compile_context>
chip_gen: v7x
topology: tpu7x:2x2x1
jax: 0.10.0
libtpu: 0.0.40
codegen_flags: <defaults>
</compile_context>

<pallas_src>
import functools

import jax
import jax.numpy as jnp
from jax import lax
from jax.experimental import pallas as pl
from jax.experimental.pallas import tpu as pltpu

_STRIP_ELEMS = 128 * 1024       # ~512 KiB of f32 intermediates per compute strip


def _cdiv(a, b):
    return -(-a // b)


def _round_up(a, b):
    return _cdiv(a, b) * b


def _chip_tile_budget():
    """(per-input per-buffer block bytes, explicit vmem_limit_bytes or None)."""
    try:
        kind = jax.devices()[0].device_kind.lower()
    except Exception:                      # pragma: no cover
        kind = ""
    if "v6" in kind:
        return 4 << 20, 64 << 20           # 128 MiB physical VMEM
    if "v7" in kind or "tpu7" in kind:
        return 4 << 20, 48 << 20           # 64 MiB physical VMEM per TensorCore
    # v5e / unknown: stay under the 16 MiB default scoped-VMEM limit.
    return 2 << 20, None


def _compiler_params(vmem_limit):
    # TODO(synk): on v7x verify the "parallel" axis actually shards across both
    # TensorCores; switch to pltpu.CORE_PARALLEL if a profile shows it does not.
    kw = dict(dimension_semantics=("parallel",))
    if vmem_limit is not None:
        kw["vmem_limit_bytes"] = int(vmem_limit)
    return pltpu.CompilerParams(**kw)


def _sublane(itemsize):
    # Native packed tile height: 8 rows for 4-byte, 16 for 2-byte, 32 for 1-byte.
    return max(8, 32 // int(itemsize))


def _tile_rows(rows, width, itemsize, sub, block_bytes):
    """Pick (block_rows, strip_rows, n_blocks) for a (rows, width) 2-D view."""
    rows_aligned = _round_up(rows, sub)
    strip = min(rows_aligned, max(sub, (_STRIP_ELEMS // width) // sub * sub))
    blk = max(strip, (block_bytes // (width * itemsize)) // strip * strip)
    blk = min(blk, _round_up(rows_aligned, strip))
    return blk, strip, _cdiv(rows, blk)


def _focal_elem(x, t, *, alpha, gamma, logits, smoothing, hard_targets):
    """Per-element focal loss in f32 (all branching resolved at trace time)."""
    if smoothing > 0.0:
        t = jnp.clip(t, smoothing, 1.0 - smoothing)
    if logits:
        # Numerically stable BCE-with-logits (matches
        # F.binary_cross_entropy_with_logits): max(x,0) - x*t + log1p(exp(-|x|))
        e = jnp.exp(-jnp.abs(x))
        bce = jnp.maximum(x, 0.0) - x * t + jnp.log1p(e)
        if hard_targets and smoothing == 0.0:
            # Valid only for t in {0,1}: pt = exp(x*t - max(x,0)) / (1+e); the
            # numerator is e when sign(x) "disagrees" with t, else 1.  Replaces
            # a full exp with a select + approximate reciprocal (EUP relief).
            num = jnp.where((t > 0.5) == (x < 0.0), e, 1.0)
            pt = num * pl.reciprocal(1.0 + e, approx=True)
        else:
            pt = jnp.exp(-bce)
    else:
        # F.binary_cross_entropy clamps the log terms at -100.
        log_p = jnp.maximum(jnp.log(x), -100.0)
        log_q = jnp.maximum(jnp.log1p(-x), -100.0)
        bce = -(t * log_p + (1.0 - t) * log_q)
        pt = jnp.exp(-bce)
    omp = 1.0 - pt
    g = float(gamma)
    if g == 0.0:
        mod = None
    elif g == int(g) and 0.0 < g <= 8.0:
        # Integer gamma (default 2.0): repeated multiply instead of generic pow.
        mod = omp
        for _ in range(int(g) - 1):
            mod = mod * omp
    else:
        mod = omp ** g
    fl = bce if mod is None else mod * bce
    if float(alpha) != 1.0:
        fl = float(alpha) * fl
    return fl


# --------------------------------------------------------------------------
# Kernels
# --------------------------------------------------------------------------
def _partial_sum_kernel(x_ref, t_ref, psum_ref, *, alpha, gamma, logits,
                        smoothing, hard_targets, strip_rows, valid_rows,
                        valid_rem):
    """Per-block, per-lane partial sums of the focal loss (global-mean path)."""
    block_rows, width = x_ref.shape
    i = pl.program_id(0)
    nstrips = block_rows // strip_rows

    def body(j, acc):
        r0 = pl.multiple_of(j * strip_rows, strip_rows)
        x = x_ref[pl.ds(r0, strip_rows), :].astype(jnp.float32)
        t = t_ref[pl.ds(r0, strip_rows), :].astype(jnp.float32)
        fl = _focal_elem(x, t, alpha=alpha, gamma=gamma, logits=logits,
                         smoothing=smoothing, hard_targets=hard_targets)
        if valid_rows is not None:
            # Ragged tail: zero rows (and, for a partially valid last row,
            # lanes) beyond the n real elements.  A select is NaN-safe against
            # whatever the boundary block's out-of-bounds region contains.
            row = (i * block_rows + r0
                   + lax.broadcasted_iota(jnp.int32, (strip_rows, 1), 0))
            keep = row < valid_rows
            if valid_rem:
                lane = lax.broadcasted_iota(jnp.int32, (strip_rows, width), 1)
                keep = keep | ((row == valid_rows) & (lane < valid_rem))
            fl = jnp.where(keep, fl, 0.0)
        return acc + jnp.sum(fl, axis=0, keepdims=True)

    psum = lax.fori_loop(0, nstrips, body, jnp.zeros((1, width), jnp.float32))
    psum_ref[...] = psum.reshape(1, 1, width)


def _row_sum_kernel(x_ref, t_ref, s_ref, *, alpha, gamma, logits, smoothing,
                    hard_targets, strip_rows):
    """Per-row (last-dim) sum of the focal loss (rating-only path)."""
    nstrips = x_ref.shape[0] // strip_rows

    def body(j, carry):
        r0 = pl.multiple_of(j * strip_rows, strip_rows)
        x = x_ref[pl.ds(r0, strip_rows), :].astype(jnp.float32)
        t = t_ref[pl.ds(r0, strip_rows), :].astype(jnp.float32)
        fl = _focal_elem(x, t, alpha=alpha, gamma=gamma, logits=logits,
                         smoothing=smoothing, hard_targets=hard_targets)
        s_ref[pl.ds(r0, strip_rows), :] = jnp.sum(fl, axis=-1, keepdims=True)
        return carry

    lax.fori_loop(0, nstrips, body, 0)


def _row_weighted_sum_kernel(x_ref, t_ref, w_ref, s_ref, ws_ref, *, alpha,
                             gamma, logits, smoothing, hard_targets,
                             strip_rows):
    """Per-row sums of fl*w and w (fused weights path)."""
    nstrips = x_ref.shape[0] // strip_rows

    def body(j, carry):
        r0 = pl.multiple_of(j * strip_rows, strip_rows)
        x = x_ref[pl.ds(r0, strip_rows), :].astype(jnp.float32)
        t = t_ref[pl.ds(r0, strip_rows), :].astype(jnp.float32)
        w = w_ref[pl.ds(r0, strip_rows), :].astype(jnp.float32)
        fl = _focal_elem(x, t, alpha=alpha, gamma=gamma, logits=logits,
                         smoothing=smoothing, hard_targets=hard_targets)
        s_ref[pl.ds(r0, strip_rows), :] = jnp.sum(fl * w, axis=-1, keepdims=True)
        ws_ref[pl.ds(r0, strip_rows), :] = jnp.sum(w, axis=-1, keepdims=True)
        return carry

    lax.fori_loop(0, nstrips, body, 0)


# --------------------------------------------------------------------------
# Wrappers
# --------------------------------------------------------------------------
def _focal_mean(y_pred, y_gt, *, alpha, gamma, logits, smoothing, hard_targets):
    """Fused global mean of the per-element focal loss (default path)."""
    n = int(y_pred.size)
    block_bytes, vmem_limit = _chip_tile_budget()
    sub = _sublane(min(y_pred.dtype.itemsize, y_gt.dtype.itemsize))
    itemsize = max(y_pred.dtype.itemsize, y_gt.dtype.itemsize)

    # Lane-dense, zero-copy 2-D view whenever a lane-friendly factor exists.
    width = next((w for w in (512, 256, 128) if n % w == 0), None)
    x_flat = y_pred.reshape(-1)
    t_flat = y_gt.reshape(-1)
    if width is None:
        last = int(y_pred.shape[-1]) if y_pred.ndim else 1
        if last * sub * 4 <= block_bytes:
            # Still zero-copy: (leading dims, last dim) view, full-extent lanes.
            width = last
        else:
            # Pathological shape (huge, lane-unfriendly last dim): one padded
            # copy + element-level masking in-kernel.
            width = 512
            pad = _round_up(n, width) - n
            x_flat = jnp.pad(x_flat, (0, pad))
            t_flat = jnp.pad(t_flat, (0, pad))
    x2 = x_flat.reshape(-1, width)
    t2 = t_flat.reshape(-1, width)
    rows = x2.shape[0]

    blk, strip, n_blocks = _tile_rows(rows, width, itemsize, sub, block_bytes)
    need_mask = (n_blocks * blk * width != n)
    valid_rows, valid_rem = divmod(n, width)

    kern = functools.partial(
        _partial_sum_kernel,
        alpha=float(alpha), gamma=float(gamma), logits=bool(logits),
        smoothing=float(smoothing), hard_targets=bool(hard_targets),
        strip_rows=strip,
        valid_rows=valid_rows if need_mask else None,
        valid_rem=valid_rem if need_mask else 0)

    partials = pl.pallas_call(
        kern,
        out_shape=jax.ShapeDtypeStruct((n_blocks, 1, width), jnp.float32),
        grid_spec=pltpu.PrefetchScalarGridSpec(
            num_scalar_prefetch=0,
            grid=(n_blocks,),
            in_specs=[pl.BlockSpec((blk, width), lambda i: (i, 0)),
                      pl.BlockSpec((blk, width), lambda i: (i, 0))],
            out_specs=pl.BlockSpec((1, 1, width), lambda i: (i, 0, 0)),
        ),
        compiler_params=_compiler_params(vmem_limit),
    )(x2, t2)
    # Tiny cross-lane / cross-block reduction (n_blocks*width values) in JAX.
    # Note: accumulated in plain f32; fine at these magnitudes.
    return jnp.sum(partials) / jnp.float32(n)


def _focal_row_sums(y_pred, y_gt, weights, *, alpha, gamma, logits, smoothing,
                    hard_targets):
    """Per-row (last-dim) sums: sum(fl) or (sum(fl*w), sum(w)); f32 outputs."""
    L = int(y_pred.shape[-1])
    R = int(y_pred.size) // L
    ins = [y_pred.reshape(R, L), y_gt.reshape(R, L)]
    if weights is not None:
        w = weights
        if w.shape != y_pred.shape:
            w = jnp.broadcast_to(w, y_pred.shape)
        ins.append(w.reshape(R, L))

    block_bytes, vmem_limit = _chip_tile_budget()
    if weights is not None:          # three double-buffered inputs, not two
        block_bytes = max(block_bytes * 2 // 3, 1 << 19)
    sub = _sublane(min(a.dtype.itemsize for a in ins))
    itemsize = max(a.dtype.itemsize for a in ins)
    # TODO(synk): rows with an extremely long last dim are not tiled along L;
    # a (sub, L) input block must fit the VMEM budget.
    blk, strip, n_blocks = _tile_rows(R, L, itemsize, sub, block_bytes)

    common = dict(alpha=float(alpha), gamma=float(gamma), logits=bool(logits),
                  smoothing=float(smoothing), hard_targets=bool(hard_targets),
                  strip_rows=strip)
    in_specs = [pl.BlockSpec((blk, L), lambda i: (i, 0)) for _ in ins]
    out_spec = pl.BlockSpec((blk, 1), lambda i: (i, 0))

    if weights is not None:
        kern = functools.partial(_row_weighted_sum_kernel, **common)
        out_shape = (jax.ShapeDtypeStruct((R, 1), jnp.float32),
                     jax.ShapeDtypeStruct((R, 1), jnp.float32))
        out_specs = [out_spec, out_spec]
    else:
        kern = functools.partial(_row_sum_kernel, **common)
        out_shape = jax.ShapeDtypeStruct((R, 1), jnp.float32)
        out_specs = out_spec

    res = pl.pallas_call(
        kern,
        out_shape=out_shape,
        grid_spec=pltpu.PrefetchScalarGridSpec(
            num_scalar_prefetch=0,
            grid=(n_blocks,),
            in_specs=in_specs,
            out_specs=out_specs,
        ),
        compiler_params=_compiler_params(vmem_limit),
    )(*ins)
    if weights is not None:
        return res[0][:, 0], res[1][:, 0]
    return res[:, 0], None


def focal_loss_v3(y_pred, y_gt, weights=None, rating=None, *, alpha=1.0,
                  gamma=2.0, logits=True, smoothing=0.0, eps=1e-6,
                  hard_targets=False):
    """Pallas TPU implementation of FocalLossV3.forward.

    `hard_targets=True` is an opt-in fast path, valid only when logits=True,
    smoothing == 0 and every target is exactly 0 or 1 (uses an approximate
    reciprocal instead of a second exp; slightly approximate).
    """
    kw = dict(alpha=alpha, gamma=gamma, logits=logits, smoothing=smoothing,
              hard_targets=hard_targets)
    if weights is None and rating is None:
        # loss.mean(dim=-1).mean() over equal-length rows == global mean.
        return _focal_mean(y_pred, y_gt, **kw)

    # Fused per-row sums from the kernel; tiny O(rows) epilogue in plain JAX.
    fl_sum, w_sum = _focal_row_sums(y_pred, y_gt, weights, **kw)
    if weights is not None:
        row_loss = fl_sum / (w_sum + eps)
    else:
        row_loss = fl_sum / jnp.float32(y_pred.shape[-1])
    row_loss = row_loss.reshape(y_pred.shape[:-1])
    if rating is not None:
        rating = rating.astype(jnp.float32)
        return (row_loss * rating).sum() / (rating.sum() + eps)
    return row_loss.mean()


# --------------------------------------------------------------------------
# Pure-JAX reference + tests
# --------------------------------------------------------------------------
def _focal_v3_ref(y_pred, y_gt, weights=None, rating=None, alpha=1.0,
                  gamma=2.0, logits=True, smoothing=0.0, eps=1e-6):
    x = y_pred.astype(jnp.float32)
    t = y_gt.astype(jnp.float32)
    if smoothing > 0.0:
        t = jnp.clip(t, smoothing, 1.0 - smoothing)
    if logits:
        bce = jnp.maximum(x, 0.0) - x * t + jnp.log1p(jnp.exp(-jnp.abs(x)))
    else:
        bce = -(t * jnp.maximum(jnp.log(x), -100.0)
                + (1.0 - t) * jnp.maximum(jnp.log1p(-x), -100.0))
    pt = jnp.exp(-bce)
    fl = alpha * (1.0 - pt) ** gamma * bce
    if weights is not None:
        loss = (fl * weights).sum(axis=-1) / (weights.sum(axis=-1) + eps)
    else:
        loss = fl.mean(axis=-1)
    if rating is not None:
        return (loss * rating).sum() / (rating.sum() + eps)
    return loss.mean()


if __name__ == "__main__":
    key = jax.random.PRNGKey(0)
    k1, k2, k3, k4 = jax.random.split(key, 4)
    shape = (2, 4, 16, 16)                       # NCHW-style segmentation logits
    y_pred = jax.random.normal(k1, shape, dtype=jnp.float32)
    y_gt = (jax.random.uniform(k2, shape) > 0.5).astype(jnp.float32)
    weights = jax.random.uniform(k3, shape, dtype=jnp.float32)
    rating = jax.random.uniform(k4, shape[:-1], dtype=jnp.float32)

    def check(out, ref, name, rtol=1e-5, atol=1e-6):
        out = jax.block_until_ready(out)
        assert jnp.allclose(out, ref, rtol=rtol, atol=atol), (name, out, ref)

    # 1) default mean path (fused partial-sum kernel, no wrapper pad/clip)
    check(focal_loss_v3(y_pred, y_gt), _focal_v3_ref(y_pred, y_gt), "mean")
    # 2) weights + rating (fused per-row weighted-sum kernel)
    check(focal_loss_v3(y_pred, y_gt, weights=weights, rating=rating),
          _focal_v3_ref(y_pred, y_gt, weights=weights, rating=rating), "w+r")
    # 3) weights only
    check(focal_loss_v3(y_pred, y_gt, weights=weights),
          _focal_v3_ref(y_pred, y_gt, weights=weights), "w")
    # 4) rating only (unweighted per-row sums)
    check(focal_loss_v3(y_pred, y_gt, rating=rating),
          _focal_v3_ref(y_pred, y_gt, rating=rating), "r")
    # 5) label smoothing (applied in-kernel)
    check(focal_loss_v3(y_pred, y_gt, smoothing=0.1),
          _focal_v3_ref(y_pred, y_gt, smoothing=0.1), "smooth")
    # 6) probabilities (logits=False)
    probs = jax.nn.sigmoid(y_pred)
    check(focal_loss_v3(probs, y_gt, logits=False),
          _focal_v3_ref(probs, y_gt, logits=False), "probs", atol=1e-5)
    # 7) ragged / lane-unfriendly shape exercising in-kernel tail masking
    shape2 = (3, 5, 7)
    yp2 = jax.random.normal(k3, shape2, dtype=jnp.float32)
    yg2 = (jax.random.uniform(k4, shape2) > 0.5).astype(jnp.float32)
    w2 = jax.random.uniform(k1, shape2, dtype=jnp.float32)
    r2 = jax.random.uniform(k2, shape2[:-1], dtype=jnp.float32)
    check(focal_loss_v3(yp2, yg2), _focal_v3_ref(yp2, yg2), "ragged-mean")
    check(focal_loss_v3(yp2, yg2, weights=w2, rating=r2),
          _focal_v3_ref(yp2, yg2, weights=w2, rating=r2), "ragged-w+r")
    # 8) bf16 inputs (packed-dtype sublane rounding, native-dtype DMA)
    yp_bf16 = y_pred.astype(jnp.bfloat16)
    check(focal_loss_v3(yp_bf16, y_gt), _focal_v3_ref(yp_bf16, y_gt),
          "bf16", atol=1e-5)
    # 9) hard_targets fast path (approximate reciprocal; opt-in)
    check(focal_loss_v3(y_pred, y_gt, hard_targets=True),
          _focal_v3_ref(y_pred, y_gt), "hard", rtol=2e-2, atol=2e-3)

    print("KERNEL_OK")
</pallas_src>

<mosaic_0001>
module attributes {stable_mosaic.version = 11 : i64} {
  func.func @_partial_sum_kernel(%arg0: i32, %arg1: memref<8x512xf32, #tpu.memory_space<vmem>>, %arg2: memref<8x512xf32, #tpu.memory_space<vmem>>, %arg3: memref<1x1x512xf32, #tpu.memory_space<vmem>>) attributes {dimension_semantics = [#tpu.dimension_semantics<parallel>], iteration_bounds = array<i64: 1>, scalar_prefetch = 0 : i64, scratch_operands = 0 : i64, tpu.core_type = #tpu.core_type<tc>, window_params = [{transform_indices = @transform_0, window_bounds = array<i64: 8, 512>}, {transform_indices = @transform_1, window_bounds = array<i64: 8, 512>}, {transform_indices = @transform_2, window_bounds = array<i64: 1, 1, 512>}]} {
    %cst = arith.constant 0.000000e+00 : f32
    %0 = vector.broadcast %cst : f32 to vector<1x512xf32>
    %c0_i32 = arith.constant 0 : i32
    %c8_i32 = arith.constant 8 : i32
    %1 = arith.muli %c0_i32, %c8_i32 : i32
    %2 = tpu.assume_multiple %1, 8 : i32
    %3 = arith.index_cast %2 : i32 to index
    %c0 = arith.constant 0 : index
    %4 = vector.load %arg1[%3, %c0] : memref<8x512xf32, #tpu.memory_space<vmem>>, vector<8x512xf32>
    %5 = arith.index_cast %2 : i32 to index
    %c0_0 = arith.constant 0 : index
    %6 = vector.load %arg2[%5, %c0_0] : memref<8x512xf32, #tpu.memory_space<vmem>>, vector<8x512xf32>
    %7 = math.absf %4 : vector<8x512xf32>
    %cst_1 = arith.constant 0.000000e+00 : f32
    %8 = vector.broadcast %cst_1 : f32 to vector<8x512xf32>
    %9 = arith.subf %8, %7 : vector<8x512xf32>
    %10 = math.exp %9 : vector<8x512xf32>
    %cst_2 = arith.constant 0.000000e+00 : f32
    %11 = vector.broadcast %cst_2 : f32 to vector<8x512xf32>
    %12 = arith.maximumf %4, %11 : vector<8x512xf32>
    %13 = arith.mulf %4, %6 : vector<8x512xf32>
    %14 = arith.subf %12, %13 : vector<8x512xf32>
    %15 = math.log1p %10 : vector<8x512xf32>
    %16 = arith.addf %14, %15 : vector<8x512xf32>
    %cst_3 = arith.constant 0.000000e+00 : f32
    %17 = vector.broadcast %cst_3 : f32 to vector<8x512xf32>
    %18 = arith.subf %17, %16 : vector<8x512xf32>
    %19 = math.exp %18 : vector<8x512xf32>
    %cst_4 = arith.constant 1.000000e+00 : f32
    %20 = vector.broadcast %cst_4 : f32 to vector<8x512xf32>
    %21 = arith.subf %20, %19 : vector<8x512xf32>
    %22 = arith.mulf %21, %21 : vector<8x512xf32>
    %23 = arith.mulf %22, %16 : vector<8x512xf32>
    %c8_i32_5 = arith.constant 8 : i32
    %24 = arith.muli %arg0, %c8_i32_5 : i32
    %25 = arith.addi %24, %2 : i32
    %26 = tpu.iota {dimensions = array<i32: 0>} : vector<8x1xi32>
    %27 = vector.broadcast %25 : i32 to vector<8x1xi32>
    %28 = arith.addi %27, %26 : vector<8x1xi32>
    %c4_i32 = arith.constant 4 : i32
    %29 = vector.broadcast %c4_i32 : i32 to vector<8x1xi32>
    %30 = arith.cmpi slt, %28, %29 : vector<8x1xi32>
    %cst_6 = arith.constant 0.000000e+00 : f32
    %31 = vector.shape_cast %30 : vector<8x1xi1> to vector<8x1xi1>
    %32 = vector.broadcast %31 : vector<8x1xi1> to vector<8x512xi1>
    %33 = vector.broadcast %cst_6 : f32 to vector<8x512xf32>
    %34 = arith.select %32, %23, %33 : vector<8x512xi1>, vector<8x512xf32>
    %cst_7 = arith.constant dense<0.000000e+00> : vector<512xf32>
    %35 = vector.multi_reduction <add>, %34, %cst_7 [0] : vector<8x512xf32> to vector<512xf32>
    %36 = vector.shape_cast %35 : vector<512xf32> to vector<1x512xf32>
    %37 = arith.addf %0, %36 : vector<1x512xf32>
    %c1_i32 = arith.constant 1 : i32
    %38 = vector.shape_cast %37 : vector<1x512xf32> to vector<1x1x512xf32>
    %c0_8 = arith.constant 0 : index
    %c0_9 = arith.constant 0 : index
    %c0_10 = arith.constant 0 : index
    %39 = vector.load %arg3[%c0_8, %c0_9, %c0_10] : memref<1x1x512xf32, #tpu.memory_space<vmem>>, vector<1x1x512xf32>
    tpu.vector_store %arg3[%c0_8, %c0_9, %c0_10], %38 {strides = array<i32>} : memref<1x1x512xf32, #tpu.memory_space<vmem>>, vector<1x1x512xf32>,
    return
  }
  func.func @transform_0(%arg0: i32) -> (i32, i32) {
    %c0_i32 = arith.constant 0 : i32
    %c0_i32_0 = arith.constant 0 : i32
    return %arg0, %c0_i32 : i32, i32
  }
  func.func @transform_1(%arg0: i32) -> (i32, i32) {
    %c0_i32 = arith.constant 0 : i32
    %c0_i32_0 = arith.constant 0 : i32
    return %arg0, %c0_i32 : i32, i32
  }
  func.func @transform_2(%arg0: i32) -> (i32, i32, i32) {
    %c0_i32 = arith.constant 0 : i32
    %c0_i32_0 = arith.constant 0 : i32
    %c0_i32_1 = arith.constant 0 : i32
    return %arg0, %c0_i32, %c0_i32_0 : i32, i32, i32
  }
}

</mosaic_0001>

<llo_original>
// kernel: tpu_custom_call.1
$region0: #{tpu_custom_call.1}
  #allocation0 [shape = 'u32[]', space=smem, size = 0x4, offset = 0x4, fixed_abs, tag = 'smem constant byte address 0x4 - core index']
  #allocation1 [shape = 'u32[144,128]{1,0:T(1,128)}', space=vmem, size = 0x12000, scoped, tag = 'internal scratch']
  %s0 = inlined_call_operand.hbm [shape: f32[4,512], index: 0, kind: input, shape index: {}]
  %s1 = inlined_call_operand.hbm [shape: f32[4,512], index: 1, kind: input, shape index: {}]
  %s2 = inlined_call_operand.hbm [shape: f32[1,1,512], index: 2, kind: output, shape index: {}]
  %s3 = sld [smem:[#allocation0]]
  $region26: #{tpu_custom_call.1} parent=0
    _
  %s5 = ssub.s32 1, %s3
  %s6 = scalar_select 0, %s5, %s3
  $region1: #{tpu_custom_call.1} parent=0
    #allocation2 [shape = 'u8[16384]{0}', space=vmem, size = 0x4000, scoped, tag = 'input window, operand 0, single buffered']
    #allocation3 [shape = 's32[1]{0}', space=sflag, size = 0x4, scoped, tag = 'scoped memory for tpu_custom_call.1']
    #allocation4 [shape = 's32[1]{0}', space=sflag, size = 0x4, scoped, tag = 'scoped memory for tpu_custom_call.1']
    #allocation5 [shape = 'u8[16384]{0}', space=vmem, size = 0x4000, scoped, tag = 'input window, operand 1, single buffered']
    #allocation6 [shape = 's32[1]{0}', space=sflag, size = 0x4, scoped, tag = 'scoped memory for tpu_custom_call.1']
    #allocation7 [shape = 'u8[2048]{0}', space=vmem, size = 0x800, scoped, tag = 'output window, operand 0, single buffered']
    %7 = vsyncpa [#allocation3], 0
    %8 = vsyncpa [#allocation6], 0
    %9 = vsyncpa [#allocation4], 0
    // Predicated region
    $region2: #{tpu_custom_call.1} parent=1 // pred_check
      _
    $region3: #{tpu_custom_call.1} parent=1 // pred_check_branch
      %11 = sbr.rel (0) target = $region5
    $region4: #{tpu_custom_call.1} parent=1 // pred_region
      %s13 = ssub.s32 512, 256
      %14 = vsyncadd [#allocation3], %s13
      %s15 = sshll.u32 [#allocation2], 4
      %s16 = int_to_ptr.vmem [resolvable:$true] %s15
      %21 = dma.hbm_to_vmem [thread:$0]  %s0, 256, %s16, [#allocation3], 256, 256, 16
    $region5: #{tpu_custom_call.1} parent=1 // pred_fallthru
      _
    // Predicated region
    $region6: #{tpu_custom_call.1} parent=1 // pred_check
      _
    $region7: #{tpu_custom_call.1} parent=1 // pred_check_branch
      %23 = sbr.rel (0) target = $region9
    $region8: #{tpu_custom_call.1} parent=1 // pred_region
      %s25 = ssub.s32 512, 256
      %26 = vsyncadd [#allocation6], %s25
      %s27 = sshll.u32 [#allocation5], 4
      %s28 = int_to_ptr.vmem [resolvable:$true] %s27
      %33 = dma.hbm_to_vmem [thread:$0]  %s1, 256, %s28, [#allocation6], 256, 256, 16
    $region9: #{tpu_custom_call.1} parent=1 // pred_fallthru
      _
    // Predicated region
    $region10: #{tpu_custom_call.1} parent=1 // pred_check
      _
    $region11: #{tpu_custom_call.1} parent=1 // pred_check_branch
      %35 = sbr.rel (0) target = $region13
    $region12: #{tpu_custom_call.1} parent=1 // pred_region
      %36 = dma.done [#allocation3], 512
    $region13: #{tpu_custom_call.1} parent=1 // pred_fallthru
      _
    // Predicated region
    $region14: #{tpu_custom_call.1} parent=1 // pred_check
      _
    $region15: #{tpu_custom_call.1} parent=1 // pred_check_branch
      %38 = sbr.rel (0) target = $region17
    $region16: #{tpu_custom_call.1} parent=1 // pred_region
      %39 = dma.done [#allocation6], 512
    $region17: #{tpu_custom_call.1} parent=1 // pred_fallthru
      _
    %s40 = smul.u32 0, 4
    %s41 = smul.addr %s40, 4
    %s42 = scalar_lea.vmem [#allocation2], %s41
    %v43 = vld [vmem:[%s42] sm:$0xff]
    %v44 = vld [vmem:[%s42 + $0x8] sm:$0xff]
    %v45 = vld [vmem:[%s42 + $0x10] sm:$0xff]
    %v46 = vld [vmem:[%s42 + $0x18] sm:$0xff]
    %s47 = smul.addr %s40, 4
    %s48 = scalar_lea.vmem [#allocation5], %s47
    %v49 = vld [vmem:[%s48] sm:$0xff]
    %v50 = vld [vmem:[%s48 + $0x8] sm:$0xff]
    %v51 = vld [vmem:[%s48 + $0x10] sm:$0xff]
    %v52 = vld [vmem:[%s48 + $0x18] sm:$0xff]
    %v53 = vand.u32 2147483647, %v43
    %v54 = vand.u32 2147483647, %v44
    %v55 = vand.u32 2147483647, %v45
    %v56 = vand.u32 2147483647, %v46
    %v57 = vsub.f32 0.0, %v53
    %v58 = vsub.f32 0.0, %v54
    %v59 = vsub.f32 0.0, %v55
    %v60 = vsub.f32 0.0, %v56
    %v61 = vmul.f32 %v57, 1.442695
    %v62 = vpow.pop %v61
    %v63 = vmul.f32 %v58, 1.442695
    %v64 = vpow.pop %v63
    %v65 = vmul.f32 %v59, 1.442695
    %v66 = vpow.pop %v65
    %v67 = vmul.f32 %v60, 1.442695
    %v68 = vpow.pop %v67
    %v69 = vmax.f32 %v43, 0.0
    %v70 = vmax.f32 %v44, 0.0
    %v71 = vmax.f32 %v45, 0.0
    %v72 = vmax.f32 %v46, 0.0
    %v73 = vmul.f32 %v43, %v49
    %v74 = vmul.f32 %v44, %v50
    %v75 = vmul.f32 %v45, %v51
    %v76 = vmul.f32 %v46, %v52
    %v77 = vsub.f32 %v69, %v73
    %v78 = vsub.f32 %v70, %v74
    %v79 = vsub.f32 %v71, %v75
    %v80 = vsub.f32 %v72, %v76
    %v81 = vadd.f32 %v62, 1.0
    %v82 = vlog2.pop %v81
    %v83 = vmul.f32 %v82, 0.6931472
    %v84 = vmul.f32 -0.5, %v62
    %v85 = vadd.f32 %v84, 1.0
    %v86 = vmul.f32 %v85, %v62
    %v87 = vand.u32 2147483647, %v62
    %vm88 = vcmp.lt.f32.partialorder %v87, 0.0004427343
    %v89 = vsel %vm88, %v86, %v83
    %v90 = vadd.f32 %v64, 1.0
    %v91 = vlog2.pop %v90
    %v92 = vmul.f32 %v91, 0.6931472
    %v93 = vmul.f32 -0.5, %v64
    %v94 = vadd.f32 %v93, 1.0
    %v95 = vmul.f32 %v94, %v64
    %v96 = vand.u32 2147483647, %v64
    %vm97 = vcmp.lt.f32.partialorder %v96, 0.0004427343
    %v98 = vsel %vm97, %v95, %v92
    %v99 = vadd.f32 %v66, 1.0
    %v100 = vlog2.pop %v99
    %v101 = vmul.f32 %v100, 0.6931472
    %v102 = vmul.f32 -0.5, %v66
    %v103 = vadd.f32 %v102, 1.0
    %v104 = vmul.f32 %v103, %v66
    %v105 = vand.u32 2147483647, %v66
    %vm106 = vcmp.lt.f32.partialorder %v105, 0.0004427343
    %v107 = vsel %vm106, %v104, %v101
    %v108 = vadd.f32 %v68, 1.0
    %v109 = vlog2.pop %v108
    %v110 = vmul.f32 %v109, 0.6931472
    %v111 = vmul.f32 -0.5, %v68
    %v112 = vadd.f32 %v111, 1.0
    %v113 = vmul.f32 %v112, %v68
    %v114 = vand.u32 2147483647, %v68
    %vm115 = vcmp.lt.f32.partialorder %v114, 0.0004427343
    %v116 = vsel %vm115, %v113, %v110
    %v117 = vadd.f32 %v77, %v89
    %v118 = vadd.f32 %v78, %v98
    %v119 = vadd.f32 %v79, %v107
    %v120 = vadd.f32 %v80, %v116
    %v121 = vsub.f32 0.0, %v117
    %v122 = vsub.f32 0.0, %v118
    %v123 = vsub.f32 0.0, %v119
    %v124 = vsub.f32 0.0, %v120
    %v125 = vmul.f32 %v121, 1.442695
    %v126 = vpow.pop %v125
    %v127 = vmul.f32 %v122, 1.442695
    %v128 = vpow.pop %v127
    %v129 = vmul.f32 %v123, 1.442695
    %v130 = vpow.pop %v129
    %v131 = vmul.f32 %v124, 1.442695
    %v132 = vpow.pop %v131
    %v133 = vsub.f32 1.0, %v126
    %v134 = vsub.f32 1.0, %v128
    %v135 = vsub.f32 1.0, %v130
    %v136 = vsub.f32 1.0, %v132
    %v137 = vmul.f32 %v133, %v133
    %v138 = vmul.f32 %v134, %v134
    %v139 = vmul.f32 %v135, %v135
    %v140 = vmul.f32 %v136, %v136
    %v141 = vmul.f32 %v137, %v117
    %v142 = vmul.f32 %v138, %v118
    %v143 = vmul.f32 %v139, %v119
    %v144 = vmul.f32 %v140, %v120
    %s145 = smul.u32 0, 8
    %s146 = sadd.s32 %s145, 0
    %v147 = vlaneseq
    %v148 = vshrl.u32 %v147, 7
    %v149 = vstv %s146
    %v150 = vadd.s32 %v149, %v148
    %vm151 = vcmp.lt.s32.totalorder %v150, 4
    %v152 = vsel %vm151, 1, 0
    %vm153 = vcmp.eq.s32.totalorder %v152, 1
    %v158 = vcombine.low %v141, %v143
    %v159 = vcombine.high %v141, %v143
    %v160 = vcombine.low %v142, %v144
    %v161 = vcombine.high %v142, %v144
    %v166 = vsel %vm153, %v158, 0.0
    %v167 = vsel %vm153, %v159, 0.0
    %v168 = vsel %vm153, %v160, 0.0
    %v169 = vsel %vm153, %v161, 0.0
    %v170 = vrot.slane %v166, 4
    %v171 = vadd.f32 %v166, %v170
    %v172 = vrot.slane %v171, 2
    %v173 = vadd.f32 %v171, %v172
    %v174 = vrot.slane %v173, 1
    %v175 = vadd.f32 %v173, %v174
    %v176 = vrot.slane %v167, 4
    %v177 = vadd.f32 %v167, %v176
    %v178 = vrot.slane %v177, 2
    %v179 = vadd.f32 %v177, %v178
    %v180 = vrot.slane %v179, 1
    %v181 = vadd.f32 %v179, %v180
    %v182 = vrot.slane %v168, 4
    %v183 = vadd.f32 %v168, %v182
    %v184 = vrot.slane %v183, 2
    %v185 = vadd.f32 %v183, %v184
    %v186 = vrot.slane %v185, 1
    %v187 = vadd.f32 %v185, %v186
    %v188 = vrot.slane %v169, 4
    %v189 = vadd.f32 %v169, %v188
    %v190 = vrot.slane %v189, 2
    %v191 = vadd.f32 %v189, %v190
    %v192 = vrot.slane %v191, 1
    %v193 = vadd.f32 %v191, %v192
    %v194 = vadd.f32 %v175, 0.0
    %v195 = vadd.f32 %v181, 0.0
    %v196 = vadd.f32 %v187, 0.0
    %v197 = vadd.f32 %v193, 0.0
    %v202 = vcombine.low %v194, %v195
    %v203 = vcombine.low %v196, %v197
    %v205 = vunpack.c.l.s4 1966171168
    %v206 = vunpack.c.0.s8 %v205
    %v207 = vlaneseq
    %v208 = vshrl.u32 %v207, 7
    %v209 = vsub.s32 %v206, %v208
    %v210 = vrot.slane %v202, %v209
    %v212 = vunpack.c.l.s4 1966171168
    %v213 = vunpack.c.0.s8 %v212
    %v214 = vlaneseq
    %v215 = vshrl.u32 %v214, 7
    %v216 = vsub.s32 %v213, %v215
    %v217 = vrot.slane %v203, %v216
    %v218 = vcombine.low %v210, %v217
    %v220 = vunpack.c.l.s4 1966171168
    %v221 = vunpack.c.0.s8 %v220
    %v222 = vlaneseq
    %v223 = vshrl.u32 %v222, 7
    %v224 = vsub.s32 %v221, %v223
    %v225 = vrot.slane %v218, %v224
    %v227 = vlaneseq
    %vm228 = vcmp.ge.s32.totalorder %v227, 0
    %vm229 = vcmp.lt.s32.totalorder %v227, 512
    %vm230 = vmand %vm228, %vm229
    %231 = vst.msk [vmem:[#allocation7] sm:$0xf] %vm230, %v225
    // Predicated region
    $region18: #{tpu_custom_call.1} parent=1 // pred_check
      _
    $region19: #{tpu_custom_call.1} parent=1 // pred_check_branch
      %233 = sbr.rel (0) target = $region21
    $region20: #{tpu_custom_call.1} parent=1 // pred_region
      %s235 = ssub.s32 64, 64
      %236 = vsyncadd [#allocation4], %s235
      %s238 = sshll.u32 [#allocation7], 4
      %s239 = int_to_ptr.vmem [resolvable:$true] %s238
      %241 = dma.vmem_to_hbm [thread:$0]  %s239, 64, %s2, [#allocation4]
    $region21: #{tpu_custom_call.1} parent=1 // pred_fallthru
      _
    // Predicated region
    $region22: #{tpu_custom_call.1} parent=1 // pred_check
      _
    $region23: #{tpu_custom_call.1} parent=1 // pred_check_branch
      %243 = sbr.rel (0) target = $region25
    $region24: #{tpu_custom_call.1} parent=1 // pred_region
      %244 = dma.done [#allocation4], 64
    $region25: #{tpu_custom_call.1} parent=1 // pred_fallthru
      _
    %245 = vsyncpa [#allocation3], 1
    %246 = vsyncpa [#allocation6], 1
    %247 = vsyncpa [#allocation4], 1

</llo_original>
